<compile_context>
chip_gen: v5e
topology: v5e:2x2
jax: 0.10.0
libtpu: 0.0.40
codegen_flags: <defaults>
</compile_context>

<pallas_src>
import jax
import jax.numpy as jnp
from jax import lax
from jax.experimental import pallas as pl
from jax.experimental.pallas import tpu as pltpu


def _round_up(x, m):
    return (x + m - 1) // m * m


def text_clf_kernel(tokens_ref, starts_ref, ends_ref, emb_ref,
                    w1_ref, b1_ref, w2_ref, b2_ref, out_ref):
    tb = starts_ref.shape[0]          # batch tile (padded, multiple of 8)
    t_pad = tokens_ref.shape[0]       # padded token count (multiple of 128)
    v_pad = emb_ref.shape[0]          # padded vocab (multiple of 128)

    # ---- EmbeddingBag(mode='mean') as MXU matmuls -----------------------------
    # seg[b, t] = 1 iff token position t belongs to bag b (padded bags are empty).
    pos = lax.broadcasted_iota(jnp.int32, (tb, t_pad), 1)
    starts = starts_ref[...]                                    # (tb, 1)
    ends = ends_ref[...]                                        # (tb, 1)
    seg = jnp.logical_and(pos >= starts, pos < ends).astype(jnp.float32)

    # onehot[t, v] = 1 iff tokens[t] == v (padded token slots are masked by seg).
    vid = lax.broadcasted_iota(jnp.int32, (t_pad, v_pad), 1)
    onehot = (vid == tokens_ref[...]).astype(jnp.float32)       # (t_pad, v_pad)

    counts_mat = jnp.dot(seg, onehot,
                         preferred_element_type=jnp.float32)    # (tb, v_pad)
    bag_sum = jnp.dot(counts_mat, emb_ref[...],
                      preferred_element_type=jnp.float32)       # (tb, D_pad)

    # PyTorch EmbeddingBag(mean) returns zeros for empty bags; guard div-by-0.
    # Exact divide (counts are tiny ints) — approx EUP reciprocal would cost accuracy.
    cnt = jnp.maximum((ends - starts).astype(jnp.float32), 1.0)  # (tb, 1)
    bags = bag_sum / cnt

    # ---- fc1 -> ReLU -> fc2 (fused epilogue) ---------------------------------
    h = jnp.dot(bags, w1_ref[...], preferred_element_type=jnp.float32) + b1_ref[...]
    h = jnp.maximum(h, 0.0)
    out_ref[...] = jnp.dot(h, w2_ref[...],
                           preferred_element_type=jnp.float32) + b2_ref[...]


def text_classification_forward(tokens, offsets, emb, w1, b1, w2, b2, *, batch_tile=8):
    """tokens: (T,) int32; offsets: (B,) int32 (bag starts). Returns (B, C) f32 logits."""
    T = tokens.shape[0]
    B = offsets.shape[0]
    V, D = emb.shape
    C = w2.shape[1]

    T_pad = _round_up(max(T, 1), 128)
    V_pad = _round_up(V, 128)
    D_pad = _round_up(D, 128)
    C_pad = _round_up(C, 128)
    B_pad = _round_up(max(B, 1), batch_tile)

    tokens = tokens.astype(jnp.int32)
    offsets = offsets.astype(jnp.int32)
    ends = jnp.concatenate([offsets[1:], jnp.array([T], jnp.int32)])

    # Pad to lane/sublane-dense shapes; padded bags are empty (start == end == T),
    # padded token slots never belong to a bag, padded vocab/feature columns are 0.
    tokens_p = jnp.zeros((T_pad, 1), jnp.int32).at[:T, 0].set(tokens)
    starts_p = jnp.full((B_pad, 1), T, jnp.int32).at[:B, 0].set(offsets)
    ends_p = jnp.full((B_pad, 1), T, jnp.int32).at[:B, 0].set(ends)

    emb_p = jnp.zeros((V_pad, D_pad), jnp.float32).at[:V, :D].set(emb)
    w1_p = jnp.zeros((D_pad, D_pad), jnp.float32).at[:D, :D].set(w1)
    b1_p = jnp.zeros((1, D_pad), jnp.float32).at[:, :D].set(b1)
    w2_p = jnp.zeros((D_pad, C_pad), jnp.float32).at[:D, :C].set(w2)
    b2_p = jnp.zeros((1, C_pad), jnp.float32).at[:, :C].set(b2)

    full = lambda i: (0, 0)
    by_batch = lambda i: (i, 0)
    grid = (B_pad // batch_tile,)

    flops = 2 * B_pad * (T_pad * V_pad + V_pad * D_pad + D_pad * D_pad + D_pad * C_pad)
    bytes_accessed = 4 * (T_pad + 2 * B_pad + V_pad * D_pad + D_pad * D_pad + D_pad
                          + D_pad * C_pad + C_pad + B_pad * C_pad)

    out_p = pl.pallas_call(
        text_clf_kernel,
        out_shape=jax.ShapeDtypeStruct((B_pad, C_pad), jnp.float32),
        grid_spec=pltpu.PrefetchScalarGridSpec(
            num_scalar_prefetch=0,
            grid=grid,
            in_specs=[
                pl.BlockSpec((T_pad, 1), full),           # tokens
                pl.BlockSpec((batch_tile, 1), by_batch),  # bag starts
                pl.BlockSpec((batch_tile, 1), by_batch),  # bag ends
                pl.BlockSpec((V_pad, D_pad), full),       # embedding table
                pl.BlockSpec((D_pad, D_pad), full),       # w1 (in, out)
                pl.BlockSpec((1, D_pad), full),           # b1
                pl.BlockSpec((D_pad, C_pad), full),       # w2 (in, out)
                pl.BlockSpec((1, C_pad), full),           # b2
            ],
            out_specs=pl.BlockSpec((batch_tile, C_pad), by_batch),
        ),
        compiler_params=pltpu.CompilerParams(
            dimension_semantics=("parallel",),
            vmem_limit_bytes=32 * 1024 * 1024,
        ),
        cost_estimate=pl.CostEstimate(flops=flops, transcendentals=0,
                                      bytes_accessed=bytes_accessed),
    )(tokens_p, starts_p, ends_p, emb_p, w1_p, b1_p, w2_p, b2_p)

    return out_p[:B, :C]


def reference_forward(tokens, offsets, emb, w1, b1, w2, b2):
    """Pure-JAX reference of the PyTorch forward."""
    T = tokens.shape[0]
    B = offsets.shape[0]
    ends = jnp.concatenate([offsets[1:], jnp.array([T], dtype=offsets.dtype)])
    pos = jnp.arange(T)
    bag_ids = jnp.sum(pos[None, :] >= offsets[:, None], axis=0) - 1
    gathered = emb[tokens]                                        # (T, D)
    sums = jax.ops.segment_sum(gathered, bag_ids, num_segments=B)
    counts = jnp.maximum(ends - offsets, 1).astype(jnp.float32)[:, None]
    bags = sums / counts
    h = jnp.maximum(bags @ w1 + b1, 0.0)
    return h @ w2 + b2


if __name__ == "__main__":
    vocab_size, embed_dim, num_class = 32, 32, 2
    batch, total_tokens = 4, 16

    key = jax.random.PRNGKey(0)
    k_emb, k_w1, k_b1, k_w2, k_b2, k_tok = jax.random.split(key, 6)

    # Deterministic parameter init (shapes follow the PyTorch module; weights stored (in, out)).
    emb = jax.random.normal(k_emb, (vocab_size, embed_dim), dtype=jnp.float32)
    w1 = jax.random.normal(k_w1, (embed_dim, embed_dim), dtype=jnp.float32) * 0.1
    b1 = jax.random.normal(k_b1, (1, embed_dim), dtype=jnp.float32) * 0.1
    w2 = jax.random.normal(k_w2, (embed_dim, num_class), dtype=jnp.float32) * 0.1
    b2 = jax.random.normal(k_b2, (1, num_class), dtype=jnp.float32) * 0.1

    # Flat token ids + bag offsets (EmbeddingBag-style inputs).
    tokens = jax.random.randint(k_tok, (total_tokens,), 0, vocab_size, dtype=jnp.int32)
    offsets = jnp.array([0, 3, 7, 12], dtype=jnp.int32)   # batch=4 bags

    out = text_classification_forward(tokens, offsets, emb, w1, b1, w2, b2)
    out = jax.block_until_ready(out)

    ref = reference_forward(tokens, offsets, emb, w1, b1, w2, b2)
    assert out.shape == (batch, num_class)
    assert jnp.allclose(out, ref, atol=1e-4, rtol=1e-4), (out, ref)

    print("KERNEL_OK")
</pallas_src>

<mosaic_0001>
module attributes {stable_mosaic.version = 11 : i64} {
  func.func @text_clf_kernel(%arg0: i32, %arg1: memref<128x1xi32, #tpu.memory_space<vmem>>, %arg2: memref<8x1xi32, #tpu.memory_space<vmem>>, %arg3: memref<8x1xi32, #tpu.memory_space<vmem>>, %arg4: memref<128x128xf32, #tpu.memory_space<vmem>>, %arg5: memref<128x128xf32, #tpu.memory_space<vmem>>, %arg6: memref<1x128xf32, #tpu.memory_space<vmem>>, %arg7: memref<128x128xf32, #tpu.memory_space<vmem>>, %arg8: memref<1x128xf32, #tpu.memory_space<vmem>>, %arg9: memref<8x128xf32, #tpu.memory_space<vmem>>) attributes {dimension_semantics = [#tpu.dimension_semantics<parallel>], iteration_bounds = array<i64: 1>, scalar_prefetch = 0 : i64, scratch_operands = 0 : i64, tpu.core_type = #tpu.core_type<tc>, window_params = [{pipeline_mode = #tpu.pipeline_mode<synchronous>, transform_indices = @transform_0, window_bounds = array<i64: 128, 1>}, {transform_indices = @transform_1, window_bounds = array<i64: 8, 1>}, {transform_indices = @transform_2, window_bounds = array<i64: 8, 1>}, {pipeline_mode = #tpu.pipeline_mode<synchronous>, transform_indices = @transform_3, window_bounds = array<i64: 128, 128>}, {pipeline_mode = #tpu.pipeline_mode<synchronous>, transform_indices = @transform_4, window_bounds = array<i64: 128, 128>}, {pipeline_mode = #tpu.pipeline_mode<synchronous>, transform_indices = @transform_5, window_bounds = array<i64: 1, 128>}, {pipeline_mode = #tpu.pipeline_mode<synchronous>, transform_indices = @transform_6, window_bounds = array<i64: 128, 128>}, {pipeline_mode = #tpu.pipeline_mode<synchronous>, transform_indices = @transform_7, window_bounds = array<i64: 1, 128>}, {transform_indices = @transform_8, window_bounds = array<i64: 8, 128>}]} {
    %0 = tpu.iota {dimensions = array<i32: 1>} : vector<8x128xi32>
    %c0 = arith.constant 0 : index
    %c0_0 = arith.constant 0 : index
    %1 = vector.load %arg2[%c0, %c0_0] : memref<8x1xi32, #tpu.memory_space<vmem>>, vector<8x1xi32>
    %c0_1 = arith.constant 0 : index
    %c0_2 = arith.constant 0 : index
    %2 = vector.load %arg3[%c0_1, %c0_2] : memref<8x1xi32, #tpu.memory_space<vmem>>, vector<8x1xi32>
    %3 = vector.broadcast %1 : vector<8x1xi32> to vector<8x128xi32>
    %4 = arith.cmpi sge, %0, %3 : vector<8x128xi32>
    %5 = vector.broadcast %2 : vector<8x1xi32> to vector<8x128xi32>
    %6 = arith.cmpi slt, %0, %5 : vector<8x128xi32>
    %7 = arith.andi %4, %6 : vector<8x128xi1>
    %8 = arith.extui %7 : vector<8x128xi1> to vector<8x128xi32>
    %9 = arith.sitofp %8 : vector<8x128xi32> to vector<8x128xf32>
    %10 = tpu.iota {dimensions = array<i32: 1>} : vector<128x128xi32>
    %c0_3 = arith.constant 0 : index
    %c0_4 = arith.constant 0 : index
    %11 = vector.load %arg1[%c0_3, %c0_4] : memref<128x1xi32, #tpu.memory_space<vmem>>, vector<128x1xi32>
    %12 = vector.broadcast %11 : vector<128x1xi32> to vector<128x128xi32>
    %13 = arith.cmpi eq, %10, %12 : vector<128x128xi32>
    %14 = arith.extui %13 : vector<128x128xi1> to vector<128x128xi32>
    %15 = arith.sitofp %14 : vector<128x128xi32> to vector<128x128xf32>
    %cst = arith.constant dense<0.000000e+00> : vector<8x128xf32>
    %16 = tpu.matmul %9, %15, %cst {dimension_numbers = #tpu.dot_dimension_numbers<[1], [0], [0], [1], [0, 0, 1, 1], [], []>} : vector<8x128xf32>, vector<128x128xf32>, vector<8x128xf32> -> vector<8x128xf32>
    %c0_5 = arith.constant 0 : index
    %c0_6 = arith.constant 0 : index
    %17 = vector.load %arg4[%c0_5, %c0_6] : memref<128x128xf32, #tpu.memory_space<vmem>>, vector<128x128xf32>
    %cst_7 = arith.constant dense<0.000000e+00> : vector<8x128xf32>
    %18 = tpu.matmul %16, %17, %cst_7 {dimension_numbers = #tpu.dot_dimension_numbers<[1], [0], [0], [1], [0, 0, 1, 1], [], []>} : vector<8x128xf32>, vector<128x128xf32>, vector<8x128xf32> -> vector<8x128xf32>
    %19 = arith.subi %2, %1 : vector<8x1xi32>
    %20 = arith.sitofp %19 : vector<8x1xi32> to vector<8x1xf32>
    %cst_8 = arith.constant 1.000000e+00 : f32
    %21 = vector.broadcast %cst_8 : f32 to vector<8x1xf32>
    %22 = arith.maximumf %20, %21 : vector<8x1xf32>
    %23 = vector.broadcast %22 : vector<8x1xf32> to vector<8x128xf32>
    %24 = arith.divf %18, %23 : vector<8x128xf32>
    %c0_9 = arith.constant 0 : index
    %c0_10 = arith.constant 0 : index
    %25 = vector.load %arg5[%c0_9, %c0_10] : memref<128x128xf32, #tpu.memory_space<vmem>>, vector<128x128xf32>
    %cst_11 = arith.constant dense<0.000000e+00> : vector<8x128xf32>
    %26 = tpu.matmul %24, %25, %cst_11 {dimension_numbers = #tpu.dot_dimension_numbers<[1], [0], [0], [1], [0, 0, 1, 1], [], []>} : vector<8x128xf32>, vector<128x128xf32>, vector<8x128xf32> -> vector<8x128xf32>
    %c0_12 = arith.constant 0 : index
    %c0_13 = arith.constant 0 : index
    %27 = vector.load %arg6[%c0_12, %c0_13] : memref<1x128xf32, #tpu.memory_space<vmem>>, vector<1x128xf32>
    %28 = vector.broadcast %27 : vector<1x128xf32> to vector<8x128xf32>
    %29 = arith.addf %26, %28 : vector<8x128xf32>
    %cst_14 = arith.constant 0.000000e+00 : f32
    %30 = vector.broadcast %cst_14 : f32 to vector<8x128xf32>
    %31 = arith.maximumf %29, %30 : vector<8x128xf32>
    %c0_15 = arith.constant 0 : index
    %c0_16 = arith.constant 0 : index
    %32 = vector.load %arg7[%c0_15, %c0_16] : memref<128x128xf32, #tpu.memory_space<vmem>>, vector<128x128xf32>
    %cst_17 = arith.constant dense<0.000000e+00> : vector<8x128xf32>
    %33 = tpu.matmul %31, %32, %cst_17 {dimension_numbers = #tpu.dot_dimension_numbers<[1], [0], [0], [1], [0, 0, 1, 1], [], []>} : vector<8x128xf32>, vector<128x128xf32>, vector<8x128xf32> -> vector<8x128xf32>
    %c0_18 = arith.constant 0 : index
    %c0_19 = arith.constant 0 : index
    %34 = vector.load %arg8[%c0_18, %c0_19] : memref<1x128xf32, #tpu.memory_space<vmem>>, vector<1x128xf32>
    %35 = vector.broadcast %34 : vector<1x128xf32> to vector<8x128xf32>
    %36 = arith.addf %33, %35 : vector<8x128xf32>
    %c0_20 = arith.constant 0 : index
    %c0_21 = arith.constant 0 : index
    %37 = vector.load %arg9[%c0_20, %c0_21] : memref<8x128xf32, #tpu.memory_space<vmem>>, vector<8x128xf32>
    tpu.vector_store %arg9[%c0_20, %c0_21], %36 {strides = array<i32>} : memref<8x128xf32, #tpu.memory_space<vmem>>, vector<8x128xf32>,
    return
  }
  func.func @transform_0(%arg0: i32) -> (i32, i32) {
    %c0_i32 = arith.constant 0 : i32
    %c0_i32_0 = arith.constant 0 : i32
    %c0_i32_1 = arith.constant 0 : i32
    return %c0_i32, %c0_i32_0 : i32, i32
  }
  func.func @transform_1(%arg0: i32) -> (i32, i32) {
    %c0_i32 = arith.constant 0 : i32
    %c0_i32_0 = arith.constant 0 : i32
    return %arg0, %c0_i32 : i32, i32
  }
  func.func @transform_2(%arg0: i32) -> (i32, i32) {
    %c0_i32 = arith.constant 0 : i32
    %c0_i32_0 = arith.constant 0 : i32
    return %arg0, %c0_i32 : i32, i32
  }
  func.func @transform_3(%arg0: i32) -> (i32, i32) {
    %c0_i32 = arith.constant 0 : i32
    %c0_i32_0 = arith.constant 0 : i32
    %c0_i32_1 = arith.constant 0 : i32
    return %c0_i32, %c0_i32_0 : i32, i32
  }
  func.func @transform_4(%arg0: i32) -> (i32, i32) {
    %c0_i32 = arith.constant 0 : i32
    %c0_i32_0 = arith.constant 0 : i32
    %c0_i32_1 = arith.constant 0 : i32
    return %c0_i32, %c0_i32_0 : i32, i32
  }
  func.func @transform_5(%arg0: i32) -> (i32, i32) {
    %c0_i32 = arith.constant 0 : i32
    %c0_i32_0 = arith.constant 0 : i32
    %c0_i32_1 = arith.constant 0 : i32
    return %c0_i32, %c0_i32_0 : i32, i32
  }
  func.func @transform_6(%arg0: i32) -> (i32, i32) {
    %c0_i32 = arith.constant 0 : i32
    %c0_i32_0 = arith.constant 0 : i32
    %c0_i32_1 = arith.constant 0 : i32
    return %c0_i32, %c0_i32_0 : i32, i32
  }
  func.func @transform_7(%arg0: i32) -> (i32, i32) {
    %c0_i32 = arith.constant 0 : i32
    %c0_i32_0 = arith.constant 0 : i32
    %c0_i32_1 = arith.constant 0 : i32
    return %c0_i32, %c0_i32_0 : i32, i32
  }
  func.func @transform_8(%arg0: i32) -> (i32, i32) {
    %c0_i32 = arith.constant 0 : i32
    %c0_i32_0 = arith.constant 0 : i32
    return %arg0, %c0_i32 : i32, i32
  }
}

</mosaic_0001>

<llo_original>
// kernel: tpu_custom_call.1
$region0: #{tpu_custom_call.1}
  #allocation0 [shape = 'u32[]', space=smem, size = 0x4, offset = 0x4, fixed_abs, tag = 'smem constant byte address 0x4 - core index']
  #allocation1 [shape = 'u32[72,128]{1,0:T(1,128)}', space=vmem, size = 0x9000, scoped, tag = 'internal scratch']
  %s0 = inlined_call_operand.vmem [shape: s32[128,1], index: 0, kind: input, shape index: {}]
  %s1 = inlined_call_operand.vmem [shape: s32[8,1], index: 1, kind: input, shape index: {}]
  %s2 = inlined_call_operand.vmem [shape: s32[8,1], index: 2, kind: input, shape index: {}]
  %s3 = inlined_call_operand.vmem [shape: f32[128,128], index: 3, kind: input, shape index: {}]
  %s4 = inlined_call_operand.hbm [shape: f32[128,128], index: 4, kind: input, shape index: {}]
  %s5 = inlined_call_operand.vmem [shape: f32[1,128], index: 5, kind: input, shape index: {}]
  %s6 = inlined_call_operand.hbm [shape: f32[128,128], index: 6, kind: input, shape index: {}]
  %s7 = inlined_call_operand.vmem [shape: f32[1,128], index: 7, kind: input, shape index: {}]
  %s8 = inlined_call_operand.hbm [shape: f32[8,128], index: 8, kind: output, shape index: {}]
  %s9 = sld [smem:[#allocation0]]
  $region50: #{tpu_custom_call.1} parent=0
    _
  %s11 = ssub.s32 1, %s9
  %s12 = scalar_select 0, %s11, %s9
  $region1: #{tpu_custom_call.1} parent=0
    #allocation2 [shape = 'u8[65536]{0}', space=vmem, size = 0x10000, scoped, tag = 'input window, operand 4, single buffered']
    #allocation3 [shape = 's32[1]{0}', space=sflag, size = 0x4, scoped, tag = 'scoped memory for tpu_custom_call.1']
    #allocation4 [shape = 's32[1]{0}', space=sflag, size = 0x4, scoped, tag = 'scoped memory for tpu_custom_call.1']
    #allocation5 [shape = 'u8[65536]{0}', space=vmem, size = 0x10000, scoped, tag = 'input window, operand 6, single buffered']
    #allocation6 [shape = 's32[1]{0}', space=sflag, size = 0x4, scoped, tag = 'scoped memory for tpu_custom_call.1']
    #allocation7 [shape = 'u8[4096]{0}', space=vmem, size = 0x1000, scoped, tag = 'output window, operand 0, single buffered']
    %13 = vsyncpa [#allocation3], 0
    %14 = vsyncpa [#allocation6], 0
    %15 = vsyncpa [#allocation4], 0
    // Predicated region
    $region2: #{tpu_custom_call.1} parent=1 // pred_check
      _
    $region3: #{tpu_custom_call.1} parent=1 // pred_check_branch
      %17 = sbr.rel (0) target = $region5
    $region4: #{tpu_custom_call.1} parent=1 // pred_region
      _
    $region5: #{tpu_custom_call.1} parent=1 // pred_fallthru
      _
    // Predicated region
    $region6: #{tpu_custom_call.1} parent=1 // pred_check
      _
    $region7: #{tpu_custom_call.1} parent=1 // pred_check_branch
      %19 = sbr.rel (0) target = $region9
    $region8: #{tpu_custom_call.1} parent=1 // pred_region
      _
    $region9: #{tpu_custom_call.1} parent=1 // pred_fallthru
      _
    // Predicated region
    $region10: #{tpu_custom_call.1} parent=1 // pred_check
      _
    $region11: #{tpu_custom_call.1} parent=1 // pred_check_branch
      %21 = sbr.rel (0) target = $region13
    $region12: #{tpu_custom_call.1} parent=1 // pred_region
      _
    $region13: #{tpu_custom_call.1} parent=1 // pred_fallthru
      _
    // Predicated region
    $region14: #{tpu_custom_call.1} parent=1 // pred_check
      _
    $region15: #{tpu_custom_call.1} parent=1 // pred_check_branch
      %23 = sbr.rel (0) target = $region17
    $region16: #{tpu_custom_call.1} parent=1 // pred_region
      _
    $region17: #{tpu_custom_call.1} parent=1 // pred_fallthru
      _
    // Predicated region
    $region18: #{tpu_custom_call.1} parent=1 // pred_check
      _
    $region19: #{tpu_custom_call.1} parent=1 // pred_check_branch
      %25 = sbr.rel (0) target = $region21
    $region20: #{tpu_custom_call.1} parent=1 // pred_region
      %27 = vsyncadd [#allocation3], 0
      %s28 = sshll.u32 %s4, 4
      %s29 = int_to_ptr.hbm [resolvable:$true] %s28
      %s30 = sshll.u32 [#allocation2], 4
      %s31 = int_to_ptr.vmem [resolvable:$true] %s30
      %36 = dma.hbm_to_vmem [thread:$0]  %s29, 2048, %s31, [#allocation3], 128, 128, 8
    $region21: #{tpu_custom_call.1} parent=1 // pred_fallthru
      _
    // Predicated region
    $region22: #{tpu_custom_call.1} parent=1 // pred_check
      _
    $region23: #{tpu_custom_call.1} parent=1 // pred_check_branch
      %38 = sbr.rel (0) target = $region25
    $region24: #{tpu_custom_call.1} parent=1 // pred_region
      _
    $region25: #{tpu_custom_call.1} parent=1 // pred_fallthru
      _
    // Predicated region
    $region26: #{tpu_custom_call.1} parent=1 // pred_check
      _
    $region27: #{tpu_custom_call.1} parent=1 // pred_check_branch
      %40 = sbr.rel (0) target = $region29
    $region28: #{tpu_custom_call.1} parent=1 // pred_region
      %42 = vsyncadd [#allocation6], 0
      %s43 = sshll.u32 %s6, 4
      %s44 = int_to_ptr.hbm [resolvable:$true] %s43
      %s45 = sshll.u32 [#allocation5], 4
      %s46 = int_to_ptr.vmem [resolvable:$true] %s45
      %51 = dma.hbm_to_vmem [thread:$0]  %s44, 2048, %s46, [#allocation6], 128, 128, 8
    $region29: #{tpu_custom_call.1} parent=1 // pred_fallthru
      _
    // Predicated region
    $region30: #{tpu_custom_call.1} parent=1 // pred_check
      _
    $region31: #{tpu_custom_call.1} parent=1 // pred_check_branch
      %53 = sbr.rel (0) target = $region33
    $region32: #{tpu_custom_call.1} parent=1 // pred_region
      _
    $region33: #{tpu_custom_call.1} parent=1 // pred_fallthru
      _
    // Predicated region
    $region34: #{tpu_custom_call.1} parent=1 // pred_check
      _
    $region35: #{tpu_custom_call.1} parent=1 // pred_check_branch
      %55 = sbr.rel (0) target = $region37
    $region36: #{tpu_custom_call.1} parent=1 // pred_region
      %57 = dma.done [#allocation3], 2048
    $region37: #{tpu_custom_call.1} parent=1 // pred_fallthru
      _
    // Predicated region
    $region38: #{tpu_custom_call.1} parent=1 // pred_check
      _
    $region39: #{tpu_custom_call.1} parent=1 // pred_check_branch
      %59 = sbr.rel (0) target = $region41
    $region40: #{tpu_custom_call.1} parent=1 // pred_region
      %61 = dma.done [#allocation6], 2048
    $region41: #{tpu_custom_call.1} parent=1 // pred_fallthru
      _
    %v62 = vlaneseq
    %v63 = vand.u32 %v62, 127
    %v64 = vld [vmem:[%s1] sm:$0xff]
    %v65 = vld [vmem:[%s2] sm:$0xff]
    %66 = vset.pattern.permute.xlu0 0
    %67 = vperm.xlu0 %66, %v64
    %v68 = vpop.permute.xlu0 %67
    %vm69 = vcmp.ge.s32.totalorder %v63, %v68
    %70 = vset.pattern.permute.xlu0 0
    %71 = vperm.xlu0 %70, %v65
    %v72 = vpop.permute.xlu0 %71
    %vm73 = vcmp.lt.s32.totalorder %v63, %v72
    %vm74 = vmand %vm69, %vm73
    %v75 = vsel %vm74, 1, 0
    %v76 = vcvt.s32.f32 %v75
    %v77 = vld [vmem:[%s0] sm:$0xff]
    %v78 = vld [vmem:[%s0 + $0x8] sm:$0xff]
    %v79 = vld [vmem:[%s0 + $0x10] sm:$0xff]
    %v80 = vld [vmem:[%s0 + $0x18] sm:$0xff]
    %v81 = vld [vmem:[%s0 + $0x20] sm:$0xff]
    %v82 = vld [vmem:[%s0 + $0x28] sm:$0xff]
    %v83 = vld [vmem:[%s0 + $0x30] sm:$0xff]
    %v84 = vld [vmem:[%s0 + $0x38] sm:$0xff]
    %v85 = vld [vmem:[%s0 + $0x40] sm:$0xff]
    %v86 = vld [vmem:[%s0 + $0x48] sm:$0xff]
    %v87 = vld [vmem:[%s0 + $0x50] sm:$0xff]
    %v88 = vld [vmem:[%s0 + $0x58] sm:$0xff]
    %v89 = vld [vmem:[%s0 + $0x60] sm:$0xff]
    %v90 = vld [vmem:[%s0 + $0x68] sm:$0xff]
    %v91 = vld [vmem:[%s0 + $0x70] sm:$0xff]
    %v92 = vld [vmem:[%s0 + $0x78] sm:$0xff]
    %93 = vset.pattern.permute.xlu0 0
    %94 = vperm.xlu0 %93, %v77
    %v95 = vpop.permute.xlu0 %94
    %96 = vset.pattern.permute.xlu0 0
    %97 = vperm.xlu0 %96, %v78
    %v98 = vpop.permute.xlu0 %97
    %99 = vset.pattern.permute.xlu0 0
    %100 = vperm.xlu0 %99, %v79
    %v101 = vpop.permute.xlu0 %100
    %102 = vset.pattern.permute.xlu0 0
    %103 = vperm.xlu0 %102, %v80
    %v104 = vpop.permute.xlu0 %103
    %105 = vset.pattern.permute.xlu0 0
    %106 = vperm.xlu0 %105, %v81
    %v107 = vpop.permute.xlu0 %106
    %108 = vset.pattern.permute.xlu0 0
    %109 = vperm.xlu0 %108, %v82
    %v110 = vpop.permute.xlu0 %109
    %111 = vset.pattern.permute.xlu0 0
    %112 = vperm.xlu0 %111, %v83
    %v113 = vpop.permute.xlu0 %112
    %114 = vset.pattern.permute.xlu0 0
    %115 = vperm.xlu0 %114, %v84
    %v116 = vpop.permute.xlu0 %115
    %117 = vset.pattern.permute.xlu0 0
    %118 = vperm.xlu0 %117, %v85
    %v119 = vpop.permute.xlu0 %118
    %120 = vset.pattern.permute.xlu0 0
    %121 = vperm.xlu0 %120, %v86
    %v122 = vpop.permute.xlu0 %121
    %123 = vset.pattern.permute.xlu0 0
    %124 = vperm.xlu0 %123, %v87
    %v125 = vpop.permute.xlu0 %124
    %126 = vset.pattern.permute.xlu0 0
    %127 = vperm.xlu0 %126, %v88
    %v128 = vpop.permute.xlu0 %127
    %129 = vset.pattern.permute.xlu0 0
    %130 = vperm.xlu0 %129, %v89
    %v131 = vpop.permute.xlu0 %130
    %132 = vset.pattern.permute.xlu0 0
    %133 = vperm.xlu0 %132, %v90
    %v134 = vpop.permute.xlu0 %133
    %135 = vset.pattern.permute.xlu0 0
    %136 = vperm.xlu0 %135, %v91
    %v137 = vpop.permute.xlu0 %136
    %138 = vset.pattern.permute.xlu0 0
    %139 = vperm.xlu0 %138, %v92
    %v140 = vpop.permute.xlu0 %139
    %vm141 = vcmp.eq.s32.totalorder %v63, %v95
    %vm142 = vcmp.eq.s32.totalorder %v63, %v98
    %vm143 = vcmp.eq.s32.totalorder %v63, %v101
    %vm144 = vcmp.eq.s32.totalorder %v63, %v104
    %vm145 = vcmp.eq.s32.totalorder %v63, %v107
    %vm146 = vcmp.eq.s32.totalorder %v63, %v110
    %vm147 = vcmp.eq.s32.totalorder %v63, %v113
    %vm148 = vcmp.eq.s32.totalorder %v63, %v116
    %vm149 = vcmp.eq.s32.totalorder %v63, %v119
    %vm150 = vcmp.eq.s32.totalorder %v63, %v122
    %vm151 = vcmp.eq.s32.totalorder %v63, %v125
    %vm152 = vcmp.eq.s32.totalorder %v63, %v128
    %vm153 = vcmp.eq.s32.totalorder %v63, %v131
    %vm154 = vcmp.eq.s32.totalorder %v63, %v134
    %vm155 = vcmp.eq.s32.totalorder %v63, %v137
    %vm156 = vcmp.eq.s32.totalorder %v63, %v140
    %v157 = vsel %vm141, 1, 0
    %v158 = vsel %vm142, 1, 0
    %v159 = vsel %vm143, 1, 0
    %v160 = vsel %vm144, 1, 0
    %v161 = vsel %vm145, 1, 0
    %v162 = vsel %vm146, 1, 0
    %v163 = vsel %vm147, 1, 0
    %v164 = vsel %vm148, 1, 0
    %v165 = vsel %vm149, 1, 0
    %v166 = vsel %vm150, 1, 0
    %v167 = vsel %vm151, 1, 0
    %v168 = vsel %vm152, 1, 0
    %v169 = vsel %vm153, 1, 0
    %v170 = vsel %vm154, 1, 0
    %v171 = vsel %vm155, 1, 0
    %v172 = vsel %vm156, 1, 0
    %v173 = vcvt.s32.f32 %v157
    %v174 = vcvt.s32.f32 %v158
    %v175 = vcvt.s32.f32 %v159
    %v176 = vcvt.s32.f32 %v160
    %v177 = vcvt.s32.f32 %v161
    %v178 = vcvt.s32.f32 %v162
    %v179 = vcvt.s32.f32 %v163
    %v180 = vcvt.s32.f32 %v164
    %v181 = vcvt.s32.f32 %v165
    %v182 = vcvt.s32.f32 %v166
    %v183 = vcvt.s32.f32 %v167
    %v184 = vcvt.s32.f32 %v168
    %v185 = vcvt.s32.f32 %v169
    %v186 = vcvt.s32.f32 %v170
    %v187 = vcvt.s32.f32 %v171
    %v188 = vcvt.s32.f32 %v172
    %189 = vmatpush.msra.mxu0 %v188
    %190 = vmatpush.msra.mxu0 %v187
    %191 = vmatpush.msra.mxu0 %v186
    %192 = vmatpush.msra.mxu0 %v185
    %193 = vmatpush.msra.mxu0 %v184
    %194 = vmatpush.msra.mxu0 %v183
    %195 = vmatpush.msra.mxu0 %v182
    %196 = vmatpush.msra.mxu0 %v181
    %197 = vmatpush.msra.mxu0 %v180
    %198 = vmatpush.msra.mxu0 %v179
    %199 = vmatpush.msra.mxu0 %v178
    %200 = vmatpush.msra.mxu0 %v177
    %201 = vmatpush.msra.mxu0 %v176
    %202 = vmatpush.msra.mxu0 %v175
    %203 = vmatpush.msra.mxu0 %v174
    %204 = vmatpush.msra.mxu0 %v173
    %205 = vmatmul.f32.gmra.mxu0 %v76
    %v206 = vpop.f32.mrf.mxu0
    %v207 = vadd.f32 0.0, %v206
    %208 = vdwg.mxu0
    %v209 = vld [vmem:[%s3] sm:$0xff]
    %v210 = vld [vmem:[%s3 + $0x8] sm:$0xff]
    %v211 = vld [vmem:[%s3 + $0x10] sm:$0xff]
    %v212 = vld [vmem:[%s3 + $0x18] sm:$0xff]
    %v213 = vld [vmem:[%s3 + $0x20] sm:$0xff]
    %v214 = vld [vmem:[%s3 + $0x28] sm:$0xff]
    %v215 = vld [vmem:[%s3 + $0x30] sm:$0xff]
    %v216 = vld [vmem:[%s3 + $0x38] sm:$0xff]
    %v217 = vld [vmem:[%s3 + $0x40] sm:$0xff]
    %v218 = vld [vmem:[%s3 + $0x48] sm:$0xff]
    %v219 = vld [vmem:[%s3 + $0x50] sm:$0xff]
    %v220 = vld [vmem:[%s3 + $0x58] sm:$0xff]
    %v221 = vld [vmem:[%s3 + $0x60] sm:$0xff]
    %v222 = vld [vmem:[%s3 + $0x68] sm:$0xff]
    %v223 = vld [vmem:[%s3 + $0x70] sm:$0xff]
    %v224 = vld [vmem:[%s3 + $0x78] sm:$0xff]
    %225 = vmatpush.msra.mxu0 %v224
    %226 = vmatpush.msra.mxu0 %v223
    %227 = vmatpush.msra.mxu0 %v222
    %228 = vmatpush.msra.mxu0 %v221
    %229 = vmatpush.msra.mxu0 %v220
    %230 = vmatpush.msra.mxu0 %v219
    %231 = vmatpush.msra.mxu0 %v218
    %232 = vmatpush.msra.mxu0 %v217
    %233 = vmatpush.msra.mxu0 %v216
    %234 = vmatpush.msra.mxu0 %v215
    %235 = vmatpush.msra.mxu0 %v214
    %236 = vmatpush.msra.mxu0 %v213
    %237 = vmatpush.msra.mxu0 %v212
    %238 = vmatpush.msra.mxu0 %v211
    %239 = vmatpush.msra.mxu0 %v210
    %240 = vmatpush.msra.mxu0 %v209
    %241 = vmatmul.f32.gmra.mxu0 %v207
    %v242 = vpop.f32.mrf.mxu0
    %v243 = vadd.f32 0.0, %v242
    %244 = vdwg.mxu0
    %v245 = vsub.s32 %v65, %v64
    %v246 = vcvt.s32.f32 %v245
    %v247 = vmax.f32 %v246, 1.0
    %249 = vset.pattern.permute.xlu0 0
    %250 = vperm.xlu0 %249, %v247
    %v251 = vpop.permute.xlu0 %250
    %v253 = vrcp.pop %v251
    %v254 = vmul.f32 %v251, %v253
    %v255 = vsub.f32 1.0, %v254
    %v256 = vmul.f32 %v253, %v255
    %v257 = vadd.f32 %v253, %v256
    %vm258 = vweird.f32 %v251
    %vm259 = vweird.f32 %v253
    %vm260 = vmor %vm258, %vm259
    %v261 = vsel %vm260, %v253, %v257
    %v262 = vand.u32 2147483647, %v251
    %vm263 = vcmp.eq.f32.partialorder %v262, 8.507059e+37
    %v264 = vand.u32 %v251, 2147483648
    %v265 = vor.u32 1.1754944e-38, %v264
    %v266 = vsel %vm263, %v265, %v261
    %v267 = vmul.f32 %v243, %v266
    %v268 = vld [vmem:[#allocation2] sm:$0xff]
    %v269 = vld [vmem:[#allocation2 + $0x8] sm:$0xff]
    %v270 = vld [vmem:[#allocation2 + $0x10] sm:$0xff]
    %v271 = vld [vmem:[#allocation2 + $0x18] sm:$0xff]
    %v272 = vld [vmem:[#allocation2 + $0x20] sm:$0xff]
    %v273 = vld [vmem:[#allocation2 + $0x28] sm:$0xff]
    %v274 = vld [vmem:[#allocation2 + $0x30] sm:$0xff]
    %v275 = vld [vmem:[#allocation2 + $0x38] sm:$0xff]
    %v276 = vld [vmem:[#allocation2 + $0x40] sm:$0xff]
    %v277 = vld [vmem:[#allocation2 + $0x48] sm:$0xff]
    %v278 = vld [vmem:[#allocation2 + $0x50] sm:$0xff]
    %v279 = vld [vmem:[#allocation2 + $0x58] sm:$0xff]
    %v280 = vld [vmem:[#allocation2 + $0x60] sm:$0xff]
    %v281 = vld [vmem:[#allocation2 + $0x68] sm:$0xff]
    %v282 = vld [vmem:[#allocation2 + $0x70] sm:$0xff]
    %v283 = vld [vmem:[#allocation2 + $0x78] sm:$0xff]
    %v284 = vld [vmem:[%s5] sm:$0x1]
    %v286 = vperm.slane %v284, 0
    %288 = vmatpush.msra.mxu0 %v283
    %289 = vmatpush.msra.mxu0 %v282
    %290 = vmatpush.msra.mxu0 %v281
    %291 = vmatpush.msra.mxu0 %v280
    %292 = vmatpush.msra.mxu0 %v279
    %293 = vmatpush.msra.mxu0 %v278
    %294 = vmatpush.msra.mxu0 %v277
    %295 = vmatpush.msra.mxu0 %v276
    %296 = vmatpush.msra.mxu0 %v275
    %297 = vmatpush.msra.mxu0 %v274
    %298 = vmatpush.msra.mxu0 %v273
    %299 = vmatpush.msra.mxu0 %v272
    %300 = vmatpush.msra.mxu0 %v271
    %301 = vmatpush.msra.mxu0 %v270
    %302 = vmatpush.msra.mxu0 %v269
    %303 = vmatpush.msra.mxu0 %v268
    %304 = vmatmul.f32.gmra.mxu0 %v267
    %v305 = vpop.f32.mrf.mxu0
    %v306 = vadd.f32 %v286, %v305
    %307 = vdwg.mxu0
    %v308 = vmax.f32 %v306, 0.0
    %v309 = vld [vmem:[#allocation5] sm:$0xff]
    %v310 = vld [vmem:[#allocation5 + $0x8] sm:$0xff]
    %v311 = vld [vmem:[#allocation5 + $0x10] sm:$0xff]
    %v312 = vld [vmem:[#allocation5 + $0x18] sm:$0xff]
    %v313 = vld [vmem:[#allocation5 + $0x20] sm:$0xff]
    %v314 = vld [vmem:[#allocation5 + $0x28] sm:$0xff]
    %v315 = vld [vmem:[#allocation5 + $0x30] sm:$0xff]
    %v316 = vld [vmem:[#allocation5 + $0x38] sm:$0xff]
    %v317 = vld [vmem:[#allocation5 + $0x40] sm:$0xff]
    %v318 = vld [vmem:[#allocation5 + $0x48] sm:$0xff]
    %v319 = vld [vmem:[#allocation5 + $0x50] sm:$0xff]
    %v320 = vld [vmem:[#allocation5 + $0x58] sm:$0xff]
    %v321 = vld [vmem:[#allocation5 + $0x60] sm:$0xff]
    %v322 = vld [vmem:[#allocation5 + $0x68] sm:$0xff]
    %v323 = vld [vmem:[#allocation5 + $0x70] sm:$0xff]
    %v324 = vld [vmem:[#allocation5 + $0x78] sm:$0xff]
    %v325 = vld [vmem:[%s7] sm:$0x1]
    %v327 = vperm.slane %v325, 0
    %329 = vmatpush.msra.mxu0 %v324
    %330 = vmatpush.msra.mxu0 %v323
    %331 = vmatpush.msra.mxu0 %v322
    %332 = vmatpush.msra.mxu0 %v321
    %333 = vmatpush.msra.mxu0 %v320
    %334 = vmatpush.msra.mxu0 %v319
    %335 = vmatpush.msra.mxu0 %v318
    %336 = vmatpush.msra.mxu0 %v317
    %337 = vmatpush.msra.mxu0 %v316
    %338 = vmatpush.msra.mxu0 %v315
    %339 = vmatpush.msra.mxu0 %v314
    %340 = vmatpush.msra.mxu0 %v313
    %341 = vmatpush.msra.mxu0 %v312
    %342 = vmatpush.msra.mxu0 %v311
    %343 = vmatpush.msra.mxu0 %v310
    %344 = vmatpush.msra.mxu0 %v309
    %345 = vmatmul.f32.gmra.mxu0 %v308
    %v346 = vpop.f32.mrf.mxu0
    %v347 = vadd.f32 %v327, %v346
    %348 = vdwg.mxu0
    %349 = vst [vmem:[#allocation7] sm:$0xff] %v347
    // Predicated region
    $region42: #{tpu_custom_call.1} parent=1 // pred_check
      _
    $region43: #{tpu_custom_call.1} parent=1 // pred_check_branch
      %351 = sbr.rel (0) target = $region45
    $region44: #{tpu_custom_call.1} parent=1 // pred_region
      %353 = vsyncadd [#allocation4], 0
      %s355 = sshll.u32 [#allocation7], 4
      %s356 = int_to_ptr.vmem [resolvable:$true] %s355
      %s357 = sshll.u32 %s8, 4
      %s358 = int_to_ptr.hbm [resolvable:$true] %s357
      %360 = dma.vmem_to_hbm [thread:$0]  %s356, 128, %s358, [#allocation4]
    $region45: #{tpu_custom_call.1} parent=1 // pred_fallthru
      _
    // Predicated region
    $region46: #{tpu_custom_call.1} parent=1 // pred_check
      _
    $region47: #{tpu_custom_call.1} parent=1 // pred_check_branch
      %362 = sbr.rel (0) target = $region49
    $region48: #{tpu_custom_call.1} parent=1 // pred_region
      %364 = dma.done [#allocation4], 128
    $region49: #{tpu_custom_call.1} parent=1 // pred_fallthru
      _
    %365 = vsyncpa [#allocation3], 1
    %366 = vsyncpa [#allocation6], 1
    %367 = vsyncpa [#allocation4], 1

</llo_original>
